<compile_context>
chip_gen: v7x
topology: tpu7x:2x2x1
jax: 0.10.0
libtpu: 0.0.40
codegen_flags: <defaults>
</compile_context>

<pallas_src>
import functools
import math

import jax
import jax.numpy as jnp
from jax import lax
from jax.experimental import pallas as pl
from jax.experimental.pallas import tpu as pltpu

_PROJ_CHUNK_MAX = 512   # max rows per K/V projection chunk (bounds the f32 intermediate)


def _self_attention_kernel(x_ref, wq_ref, bq_ref, wk_ref, bk_ref, wv_ref, bv_ref,
                           out_ref, attn_ref, k_scratch, v_scratch,
                           *, tq, seq_len, proj_chunk):
    """One (batch, query-tile) grid step.

    x_ref:            (S, H)   full-sequence input for this batch element (resident across qi)
    wq_ref/bq_ref:    (H, dk) / (1, dk)   query weights/bias with 1/sqrt(dk) folded in
    wk_ref/bk_ref, wv_ref/bv_ref:         key / value projection params
    out_ref:          (TQ, dk)
    attn_ref:         (TQ, S)
    k_scratch/v_scratch: (S, dk) each -- separate, lane-aligned carried buffers
    """
    qi = pl.program_id(1)

    # --- K / V projection for the whole sequence: once per batch element (first query
    # tile), chunked over rows so the f32 intermediate stays bounded, stored in two
    # separate scratch buffers (no fused-lane packing, no per-tile column slices).
    @pl.when(qi == 0)
    def _():
        def project_rows(row_start, n_rows, full):
            xr = x_ref[...] if full else x_ref[pl.ds(row_start, n_rows), :]
            kf = (jnp.dot(xr, wk_ref[...], preferred_element_type=jnp.float32)
                  + bk_ref[...].astype(jnp.float32))
            vf = (jnp.dot(xr, wv_ref[...], preferred_element_type=jnp.float32)
                  + bv_ref[...].astype(jnp.float32))
            if full:
                k_scratch[...] = kf.astype(k_scratch.dtype)
                v_scratch[...] = vf.astype(v_scratch.dtype)
            else:
                k_scratch[pl.ds(row_start, n_rows), :] = kf.astype(k_scratch.dtype)
                v_scratch[pl.ds(row_start, n_rows), :] = vf.astype(v_scratch.dtype)

        if proj_chunk == seq_len:
            project_rows(0, seq_len, True)
        else:
            def body(c, carry):
                project_rows(pl.multiple_of(c * proj_chunk, 8), proj_chunk, False)
                return carry
            lax.fori_loop(0, seq_len // proj_chunk, body, 0)

    # --- Per-tile query projection from the resident x rows (scale already folded in).
    if tq == seq_len:
        xq = x_ref[...]
    else:
        row = pl.multiple_of(qi * tq, 8)            # tq is a multiple of 8 when tq < S
        xq = x_ref[pl.ds(row, tq), :]
    q = (jnp.dot(xq, wq_ref[...], preferred_element_type=jnp.float32)
         + bq_ref[...].astype(jnp.float32)).astype(x_ref.dtype)       # (tq, dk)

    k = k_scratch[...]                                                 # (S, dk)
    v = v_scratch[...]                                                 # (S, dk)

    # scores = q @ k^T as a transposed contraction (MXU-fed directly, no k.T materialized).
    scores = lax.dot_general(q, k, (((1,), (1,)), ((), ())),
                             preferred_element_type=jnp.float32)       # (tq, S)

    # Numerically stable softmax over the key axis (f32 math). Exact reciprocal so the
    # user-visible attention rows sum to 1 (matches jax.nn.softmax / torch softmax).
    m = jnp.max(scores, axis=-1, keepdims=True)
    e = jnp.exp(scores - m)
    s = jnp.sum(e, axis=-1, keepdims=True)
    probs = e * pl.reciprocal(s)                                       # (tq, S) f32

    # Dropout is identity in eval mode.

    out = jnp.dot(probs.astype(v.dtype), v, preferred_element_type=jnp.float32)

    # TODO(synk): pad dk / S to multiples of 128 upstream (with -inf key masking) for
    # lane-dense unmasked stores when this is used with small per-head dk.
    out_ref[...] = out.astype(out_ref.dtype)
    attn_ref[...] = probs.astype(attn_ref.dtype)


def _vmem_capacity_bytes():
    """Per-core VMEM capacity; conservative fallback if the query is unavailable."""
    try:
        cap = getattr(pltpu.get_tpu_info(), "vmem_capacity_bytes", None)
        if cap:
            return int(cap)
    except Exception:
        pass
    return 64 * 1024 * 1024   # v7x per-TensorCore VMEM -- safe on every generation


def _pick_query_tile(S, H, dk, in_itemsize, out_itemsize, budget):
    """Largest query tile (multiple of 8 dividing S, preferring 256-multiples, or full S)
    whose resident + per-tile + projection working set fits the VMEM budget."""
    resident = (2 * S * H                     # x, double-buffered by the pipeline
                + 2 * S * dk                  # K and V carried scratch
                + 2 * 3 * (H * dk + dk)       # weights/biases, double-buffered
                ) * in_itemsize
    proj = 2 * min(S, _PROJ_CHUNK_MAX) * dk * 4   # f32 K/V projection chunk intermediates

    candidates = [S] + [t for t in (2048, 1024, 768, 512, 256, 128, 64, 32, 16, 8)
                        if t < S and S % t == 0]
    for tq in candidates:
        per_tile = (2 * tq * dk * 4                        # q + out accumulators (f32)
                    + 3 * tq * S * 4                       # scores / exp / probs (f32)
                    + 2 * (tq * dk + tq * S) * out_itemsize)   # double-buffered outputs
        if resident + proj + per_tile <= budget:
            return tq
    # TODO(synk): pad S upstream (with -inf key masking) for finer tiling when S has no
    #             small divisors or the smallest candidate still exceeds the budget.
    return candidates[-1]


def self_attention(x, wq, bq, wk, bk, wv, bv):
    """x: (B, S, H); w*: (H, dk); b*: (1, dk) -> (output (B, S, dk), attn (B, S, S))."""
    B, S, H = x.shape
    dk = wq.shape[1]
    dt = x.dtype

    # Fold the 1/sqrt(dk) attention scale into the query projection (free at trace time).
    scale = 1.0 / math.sqrt(dk)
    wq_s = (wq * scale).astype(dt)
    bq_s = (bq * scale).astype(dt)
    wk = wk.astype(dt); bk = bk.astype(dt)
    wv = wv.astype(dt); bv = bv.astype(dt)

    # Generation-aware VMEM sizing (128 MiB on v5e/v6e, 64 MiB/TC on v7x).
    cap = _vmem_capacity_bytes()
    tile_budget = int(cap * 0.60)
    vmem_limit = int(cap * 0.80)

    itemsize = jnp.dtype(dt).itemsize
    tq = _pick_query_tile(S, H, dk, itemsize, itemsize, tile_budget)
    num_q_tiles = S // tq

    proj_chunk = S
    for c in (_PROJ_CHUNK_MAX, 256, 128, 64, 32, 16, 8):
        if S % c == 0:
            proj_chunk = c
            break

    kernel = functools.partial(_self_attention_kernel,
                               tq=tq, seq_len=S, proj_chunk=proj_chunk)

    out, attn = pl.pallas_call(
        kernel,
        out_shape=(
            jax.ShapeDtypeStruct((B, S, dk), dt),
            jax.ShapeDtypeStruct((B, S, S), dt),
        ),
        grid_spec=pltpu.PrefetchScalarGridSpec(
            num_scalar_prefetch=0,
            grid=(B, num_q_tiles),
            in_specs=[
                # Full-sequence x per batch element; constant block index across the
                # query-tile axis so it is DMA'd once per batch element.
                pl.BlockSpec((None, S, H), lambda b, q: (b, 0, 0)),
                pl.BlockSpec((H, dk), lambda b, q: (0, 0)),   # Wq * scale, resident
                pl.BlockSpec((1, dk), lambda b, q: (0, 0)),   # bq * scale
                pl.BlockSpec((H, dk), lambda b, q: (0, 0)),   # Wk
                pl.BlockSpec((1, dk), lambda b, q: (0, 0)),   # bk
                pl.BlockSpec((H, dk), lambda b, q: (0, 0)),   # Wv
                pl.BlockSpec((1, dk), lambda b, q: (0, 0)),   # bv
            ],
            out_specs=(
                pl.BlockSpec((None, tq, dk), lambda b, q: (b, q, 0)),
                pl.BlockSpec((None, tq, S), lambda b, q: (b, q, 0)),
            ),
            scratch_shapes=[
                pltpu.VMEM((S, dk), dt),   # K -- separate, lane-aligned buffer
                pltpu.VMEM((S, dk), dt),   # V
            ],
        ),
        compiler_params=pltpu.CompilerParams(
            # Batch axis shards across TensorCores; the query-tile axis is "arbitrary"
            # because the K/V scratch is carried (computed at qi == 0) across it.
            dimension_semantics=("parallel", "arbitrary"),
            vmem_limit_bytes=vmem_limit,
        ),
    )(x, wq_s, bq_s, wk, bk, wv, bv)
    return out, attn


def _reference(x, wq, bq, wk, bk, wv, bv, dk):
    q = x @ wq + bq
    k = x @ wk + bk
    v = x @ wv + bv
    scores = jnp.einsum("bqd,bkd->bqk", q, k) / math.sqrt(dk)
    probs = jax.nn.softmax(scores, axis=-1)
    return probs @ v, probs


if __name__ == "__main__":
    B, S, H, DK = 2, 8, 32, 16
    key = jax.random.PRNGKey(0)
    kx, kq, kbq, kk, kbk, kv, kbv = jax.random.split(key, 7)

    x = jax.random.normal(kx, (B, S, H), dtype=jnp.float32)

    # Deterministic parameter init (mimics nn.Linear uniform(-1/sqrt(H), 1/sqrt(H))),
    # stored pre-transposed as (H, dk).
    bound = 1.0 / math.sqrt(H)
    wq = jax.random.uniform(kq, (H, DK), jnp.float32, -bound, bound)
    bq = jax.random.uniform(kbq, (1, DK), jnp.float32, -bound, bound)
    wk = jax.random.uniform(kk, (H, DK), jnp.float32, -bound, bound)
    bk = jax.random.uniform(kbk, (1, DK), jnp.float32, -bound, bound)
    wv = jax.random.uniform(kv, (H, DK), jnp.float32, -bound, bound)
    bv = jax.random.uniform(kbv, (1, DK), jnp.float32, -bound, bound)

    out, attn = self_attention(x, wq, bq, wk, bk, wv, bv)
    jax.block_until_ready((out, attn))

    ref_out, ref_attn = _reference(x, wq, bq, wk, bk, wv, bv, DK)
    assert jnp.allclose(out, ref_out, atol=2e-3, rtol=2e-3), "output mismatch"
    assert jnp.allclose(attn, ref_attn, atol=2e-3, rtol=2e-3), "attention mismatch"

    print("KERNEL_OK")
</pallas_src>

<mosaic_0001>
module attributes {stable_mosaic.version = 11 : i64} {
  func.func @_self_attention_kernel(%arg0: i32, %arg1: i32, %arg2: memref<1x8x32xf32, #tpu.memory_space<vmem>>, %arg3: memref<32x16xf32, #tpu.memory_space<vmem>>, %arg4: memref<1x16xf32, #tpu.memory_space<vmem>>, %arg5: memref<32x16xf32, #tpu.memory_space<vmem>>, %arg6: memref<1x16xf32, #tpu.memory_space<vmem>>, %arg7: memref<32x16xf32, #tpu.memory_space<vmem>>, %arg8: memref<1x16xf32, #tpu.memory_space<vmem>>, %arg9: memref<1x8x16xf32, #tpu.memory_space<vmem>>, %arg10: memref<1x8x8xf32, #tpu.memory_space<vmem>>, %arg11: memref<8x16xf32, #tpu.memory_space<vmem>>, %arg12: memref<8x16xf32, #tpu.memory_space<vmem>>) attributes {dimension_semantics = [#tpu.dimension_semantics<parallel>, #tpu.dimension_semantics<arbitrary>], iteration_bounds = array<i64: 2, 1>, scalar_prefetch = 0 : i64, scratch_operands = 2 : i64, tpu.core_type = #tpu.core_type<tc>, window_params = [{transform_indices = @transform_0, window_bounds = array<i64: 1, 8, 32>}, {pipeline_mode = #tpu.pipeline_mode<synchronous>, transform_indices = @transform_1, window_bounds = array<i64: 32, 16>}, {pipeline_mode = #tpu.pipeline_mode<synchronous>, transform_indices = @transform_2, window_bounds = array<i64: 1, 16>}, {pipeline_mode = #tpu.pipeline_mode<synchronous>, transform_indices = @transform_3, window_bounds = array<i64: 32, 16>}, {pipeline_mode = #tpu.pipeline_mode<synchronous>, transform_indices = @transform_4, window_bounds = array<i64: 1, 16>}, {pipeline_mode = #tpu.pipeline_mode<synchronous>, transform_indices = @transform_5, window_bounds = array<i64: 32, 16>}, {pipeline_mode = #tpu.pipeline_mode<synchronous>, transform_indices = @transform_6, window_bounds = array<i64: 1, 16>}, {transform_indices = @transform_7, window_bounds = array<i64: 1, 8, 16>}, {transform_indices = @transform_8, window_bounds = array<i64: 1, 8, 8>}]} {
    %c0_i32 = arith.constant 0 : i32
    %0 = arith.cmpi eq, %arg1, %c0_i32 : i32
    %1 = arith.extui %0 : i1 to i32
    %c0_i32_0 = arith.constant 0 : i32
    %2 = arith.cmpi ne, %1, %c0_i32_0 : i32
    scf.if %2 {
      %c0_21 = arith.constant 0 : index
      %c0_22 = arith.constant 0 : index
      %c0_23 = arith.constant 0 : index
      %30 = vector.load %arg2[%c0_21, %c0_22, %c0_23] : memref<1x8x32xf32, #tpu.memory_space<vmem>>, vector<1x8x32xf32>
      %31 = vector.shape_cast %30 : vector<1x8x32xf32> to vector<8x32xf32>
      %c0_24 = arith.constant 0 : index
      %c0_25 = arith.constant 0 : index
      %32 = vector.load %arg5[%c0_24, %c0_25] : memref<32x16xf32, #tpu.memory_space<vmem>>, vector<32x16xf32>
      %cst_26 = arith.constant dense<0.000000e+00> : vector<8x16xf32>
      %33 = tpu.matmul %31, %32, %cst_26 {dimension_numbers = #tpu.dot_dimension_numbers<[1], [0], [0], [1], [0, 0, 1, 1], [], []>} : vector<8x32xf32>, vector<32x16xf32>, vector<8x16xf32> -> vector<8x16xf32>
      %c0_27 = arith.constant 0 : index
      %c0_28 = arith.constant 0 : index
      %34 = vector.load %arg6[%c0_27, %c0_28] : memref<1x16xf32, #tpu.memory_space<vmem>>, vector<1x16xf32>
      %35 = vector.broadcast %34 : vector<1x16xf32> to vector<8x16xf32>
      %36 = arith.addf %33, %35 : vector<8x16xf32>
      %c0_29 = arith.constant 0 : index
      %c0_30 = arith.constant 0 : index
      %37 = vector.load %arg7[%c0_29, %c0_30] : memref<32x16xf32, #tpu.memory_space<vmem>>, vector<32x16xf32>
      %cst_31 = arith.constant dense<0.000000e+00> : vector<8x16xf32>
      %38 = tpu.matmul %31, %37, %cst_31 {dimension_numbers = #tpu.dot_dimension_numbers<[1], [0], [0], [1], [0, 0, 1, 1], [], []>} : vector<8x32xf32>, vector<32x16xf32>, vector<8x16xf32> -> vector<8x16xf32>
      %c0_32 = arith.constant 0 : index
      %c0_33 = arith.constant 0 : index
      %39 = vector.load %arg8[%c0_32, %c0_33] : memref<1x16xf32, #tpu.memory_space<vmem>>, vector<1x16xf32>
      %40 = vector.broadcast %39 : vector<1x16xf32> to vector<8x16xf32>
      %41 = arith.addf %38, %40 : vector<8x16xf32>
      %c0_34 = arith.constant 0 : index
      %c0_35 = arith.constant 0 : index
      %42 = vector.load %arg11[%c0_34, %c0_35] : memref<8x16xf32, #tpu.memory_space<vmem>>, vector<8x16xf32>
      tpu.vector_store %arg11[%c0_34, %c0_35], %36 {strides = array<i32>} : memref<8x16xf32, #tpu.memory_space<vmem>>, vector<8x16xf32>,
      %c0_36 = arith.constant 0 : index
      %c0_37 = arith.constant 0 : index
      %43 = vector.load %arg12[%c0_36, %c0_37] : memref<8x16xf32, #tpu.memory_space<vmem>>, vector<8x16xf32>
      tpu.vector_store %arg12[%c0_36, %c0_37], %41 {strides = array<i32>} : memref<8x16xf32, #tpu.memory_space<vmem>>, vector<8x16xf32>,
    } else {
    }
    %c0 = arith.constant 0 : index
    %c0_1 = arith.constant 0 : index
    %c0_2 = arith.constant 0 : index
    %3 = vector.load %arg2[%c0, %c0_1, %c0_2] : memref<1x8x32xf32, #tpu.memory_space<vmem>>, vector<1x8x32xf32>
    %4 = vector.shape_cast %3 : vector<1x8x32xf32> to vector<8x32xf32>
    %c0_3 = arith.constant 0 : index
    %c0_4 = arith.constant 0 : index
    %5 = vector.load %arg3[%c0_3, %c0_4] : memref<32x16xf32, #tpu.memory_space<vmem>>, vector<32x16xf32>
    %cst = arith.constant dense<0.000000e+00> : vector<8x16xf32>
    %6 = tpu.matmul %4, %5, %cst {dimension_numbers = #tpu.dot_dimension_numbers<[1], [0], [0], [1], [0, 0, 1, 1], [], []>} : vector<8x32xf32>, vector<32x16xf32>, vector<8x16xf32> -> vector<8x16xf32>
    %c0_5 = arith.constant 0 : index
    %c0_6 = arith.constant 0 : index
    %7 = vector.load %arg4[%c0_5, %c0_6] : memref<1x16xf32, #tpu.memory_space<vmem>>, vector<1x16xf32>
    %8 = vector.broadcast %7 : vector<1x16xf32> to vector<8x16xf32>
    %9 = arith.addf %6, %8 : vector<8x16xf32>
    %c0_7 = arith.constant 0 : index
    %c0_8 = arith.constant 0 : index
    %10 = vector.load %arg11[%c0_7, %c0_8] : memref<8x16xf32, #tpu.memory_space<vmem>>, vector<8x16xf32>
    %c0_9 = arith.constant 0 : index
    %c0_10 = arith.constant 0 : index
    %11 = vector.load %arg12[%c0_9, %c0_10] : memref<8x16xf32, #tpu.memory_space<vmem>>, vector<8x16xf32>
    %cst_11 = arith.constant dense<0.000000e+00> : vector<8x8xf32>
    %12 = tpu.matmul %9, %10, %cst_11 {dimension_numbers = #tpu.dot_dimension_numbers<[1], [1], [0], [0], [0, 0, 1, 0], [], []>} : vector<8x16xf32>, vector<8x16xf32>, vector<8x8xf32> -> vector<8x8xf32>
    %cst_12 = arith.constant dense<0xFF800000> : vector<8xf32>
    %13 = vector.multi_reduction <maximumf>, %12, %cst_12 [1] : vector<8x8xf32> to vector<8xf32>
    %14 = vector.shape_cast %13 : vector<8xf32> to vector<8x1xf32>
    %15 = vector.broadcast %14 : vector<8x1xf32> to vector<8x8xf32>
    %16 = arith.subf %12, %15 : vector<8x8xf32>
    %17 = math.exp %16 : vector<8x8xf32>
    %cst_13 = arith.constant dense<0.000000e+00> : vector<8xf32>
    %18 = vector.multi_reduction <add>, %17, %cst_13 [1] : vector<8x8xf32> to vector<8xf32>
    %19 = vector.shape_cast %18 : vector<8xf32> to vector<8x1xf32>
    %20 = tpu.reciprocal %19 : vector<8x1xf32> -> vector<8x1xf32>
    %21 = vector.broadcast %20 : vector<8x1xf32> to vector<8x8xf32>
    %22 = arith.mulf %17, %21 : vector<8x8xf32>
    %cst_14 = arith.constant dense<0.000000e+00> : vector<8x16xf32>
    %23 = tpu.matmul %22, %11, %cst_14 {dimension_numbers = #tpu.dot_dimension_numbers<[1], [0], [0], [1], [0, 0, 1, 1], [], []>} : vector<8x8xf32>, vector<8x16xf32>, vector<8x16xf32> -> vector<8x16xf32>
    %c0_15 = arith.constant 0 : index
    %c0_16 = arith.constant 0 : index
    %c0_17 = arith.constant 0 : index
    %24 = vector.load %arg9[%c0_15, %c0_16, %c0_17] : memref<1x8x16xf32, #tpu.memory_space<vmem>>, vector<1x8x16xf32>
    %25 = vector.shape_cast %24 : vector<1x8x16xf32> to vector<8x16xf32>
    %26 = vector.shape_cast %23 : vector<8x16xf32> to vector<1x8x16xf32>
    tpu.vector_store %arg9[%c0_15, %c0_16, %c0_17], %26 {strides = array<i32>} : memref<1x8x16xf32, #tpu.memory_space<vmem>>, vector<1x8x16xf32>,
    %c0_18 = arith.constant 0 : index
    %c0_19 = arith.constant 0 : index
    %c0_20 = arith.constant 0 : index
    %27 = vector.load %arg10[%c0_18, %c0_19, %c0_20] : memref<1x8x8xf32, #tpu.memory_space<vmem>>, vector<1x8x8xf32>
    %28 = vector.shape_cast %27 : vector<1x8x8xf32> to vector<8x8xf32>
    %29 = vector.shape_cast %22 : vector<8x8xf32> to vector<1x8x8xf32>
    tpu.vector_store %arg10[%c0_18, %c0_19, %c0_20], %29 {strides = array<i32>} : memref<1x8x8xf32, #tpu.memory_space<vmem>>, vector<1x8x8xf32>,
    return
  }
  func.func @transform_0(%arg0: i32, %arg1: i32) -> (i32, i32, i32) {
    %c0_i32 = arith.constant 0 : i32
    %c0_i32_0 = arith.constant 0 : i32
    %c0_i32_1 = arith.constant 0 : i32
    return %arg0, %c0_i32, %c0_i32_0 : i32, i32, i32
  }
  func.func @transform_1(%arg0: i32, %arg1: i32) -> (i32, i32) {
    %c0_i32 = arith.constant 0 : i32
    %c0_i32_0 = arith.constant 0 : i32
    %c0_i32_1 = arith.constant 0 : i32
    return %c0_i32, %c0_i32_0 : i32, i32
  }
  func.func @transform_2(%arg0: i32, %arg1: i32) -> (i32, i32) {
    %c0_i32 = arith.constant 0 : i32
    %c0_i32_0 = arith.constant 0 : i32
    %c0_i32_1 = arith.constant 0 : i32
    return %c0_i32, %c0_i32_0 : i32, i32
  }
  func.func @transform_3(%arg0: i32, %arg1: i32) -> (i32, i32) {
    %c0_i32 = arith.constant 0 : i32
    %c0_i32_0 = arith.constant 0 : i32
    %c0_i32_1 = arith.constant 0 : i32
    return %c0_i32, %c0_i32_0 : i32, i32
  }
  func.func @transform_4(%arg0: i32, %arg1: i32) -> (i32, i32) {
    %c0_i32 = arith.constant 0 : i32
    %c0_i32_0 = arith.constant 0 : i32
    %c0_i32_1 = arith.constant 0 : i32
    return %c0_i32, %c0_i32_0 : i32, i32
  }
  func.func @transform_5(%arg0: i32, %arg1: i32) -> (i32, i32) {
    %c0_i32 = arith.constant 0 : i32
    %c0_i32_0 = arith.constant 0 : i32
    %c0_i32_1 = arith.constant 0 : i32
    return %c0_i32, %c0_i32_0 : i32, i32
  }
  func.func @transform_6(%arg0: i32, %arg1: i32) -> (i32, i32) {
    %c0_i32 = arith.constant 0 : i32
    %c0_i32_0 = arith.constant 0 : i32
    %c0_i32_1 = arith.constant 0 : i32
    return %c0_i32, %c0_i32_0 : i32, i32
  }
  func.func @transform_7(%arg0: i32, %arg1: i32) -> (i32, i32, i32) {
    %c0_i32 = arith.constant 0 : i32
    %c0_i32_0 = arith.constant 0 : i32
    return %arg0, %arg1, %c0_i32 : i32, i32, i32
  }
  func.func @transform_8(%arg0: i32, %arg1: i32) -> (i32, i32, i32) {
    %c0_i32 = arith.constant 0 : i32
    %c0_i32_0 = arith.constant 0 : i32
    return %arg0, %arg1, %c0_i32 : i32, i32, i32
  }
}

</mosaic_0001>

<llo_original>
// kernel: tpu_custom_call.1
$region0: #{tpu_custom_call.1}
  #allocation0 [shape = 'u32[]', space=smem, size = 0x4, offset = 0x4, fixed_abs, tag = 'smem constant byte address 0x4 - core index']
  #allocation1 [shape = 'u32[144,128]{1,0:T(1,128)}', space=vmem, size = 0x12000, scoped, tag = 'internal scratch']
  #allocation2 [shape = 'f32[8,16]{1,0:T(8,128)}', space=vmem, size = 0x1000, scoped, tag = 'scratch operand']
  #allocation3 [shape = 'f32[8,16]{1,0:T(8,128)}', space=vmem, size = 0x1000, scoped, tag = 'scratch operand']
  %s0 = inlined_call_operand.vmem [shape: f32[2,8,32], index: 0, kind: input, shape index: {}]
  %s1 = inlined_call_operand.vmem [shape: f32[32,16], index: 1, kind: input, shape index: {}]
  %s2 = inlined_call_operand.vmem [shape: f32[1,16], index: 2, kind: input, shape index: {}]
  %s3 = inlined_call_operand.vmem [shape: f32[32,16], index: 3, kind: input, shape index: {}]
  %s4 = inlined_call_operand.vmem [shape: f32[1,16], index: 4, kind: input, shape index: {}]
  %s5 = inlined_call_operand.vmem [shape: f32[32,16], index: 5, kind: input, shape index: {}]
  %s6 = inlined_call_operand.vmem [shape: f32[1,16], index: 6, kind: input, shape index: {}]
  %s7 = inlined_call_operand.hbm [shape: f32[2,8,16], index: 7, kind: output, shape index: {0}]
  %s8 = inlined_call_operand.hbm [shape: f32[2,8,8], index: 8, kind: output, shape index: {1}]
  %9 = xla_tuple %s7, %s8
  %s10 = sld [smem:[#allocation0]]
  $region73: #{tpu_custom_call.1} parent=0
    _
  %s12 = ssub.s32 1, %s10
  %s13 = scalar_select 0, %s12, %s10
  $region1: #{tpu_custom_call.1} parent=0
    #allocation4 [shape = 'u8[8192]{0}', space=vmem, size = 0x2000, scoped, tag = 'output window, operand 0']
    #allocation5 [shape = 's32[2]{0}', space=sflag, size = 0x8, scoped, tag = 'scoped memory for tpu_custom_call.1']
    #allocation6 [shape = 'u8[8192]{0}', space=vmem, size = 0x2000, scoped, tag = 'output window, operand 1']
    #allocation7 [shape = 's32[2]{0}', space=sflag, size = 0x8, scoped, tag = 'scoped memory for tpu_custom_call.1']
    %14 = vsyncpa [#allocation5], 0
    %s15 = scalar_lea.sflag [#allocation5], 1
    %16 = vsyncpa %s15, 0
    %17 = vsyncpa [#allocation7], 0
    %s18 = scalar_lea.sflag [#allocation7], 1
    %19 = vsyncpa %s18, 0
    loop: start=0, step=1, limit=4
    $region2: #{tpu_custom_call.1} parent=1 // loop_pre_header
      _
    $region3: #{tpu_custom_call.1} parent=1 // loop_header
      %s21 = sphi 0, %s25
      %p22 = scmp.ge.s32.totalorder %s21, 4
      %s28 = sphi 0, %s40
      %s29 = sphi 0, %s36
      %s30 = sphi 0, %s28
      %s31 = sphi 0, %s29
      %s32 = sphi 0, %s30
      %s33 = sphi 0, %s31
      %s43 = sphi 0, %s45
      %s46 = sphi 0, %s43
      %s47 = sphi 0, %s46
      %s63 = sphi 0, %s47
      %s67 = sphi 0, %s67
      %s69 = sphi 0, %s67
      %s70 = sphi 0, %s69
      %s84 = sphi 0, %s70
      %s88 = sphi 0, %s88
      %s90 = sphi 0, %s88
      %s91 = sphi 0, %s90
      %s105 = sphi 0, %s91
      %s109 = sphi 0, %s109
      %s111 = sphi 0, %s109
      %s112 = sphi 0, %s111
      %s126 = sphi 0, %s112
      %s130 = sphi 0, %s130
      %s132 = sphi 0, %s130
      %s133 = sphi 0, %s132
      %s147 = sphi 0, %s133
      %s151 = sphi 0, %s151
      %s153 = sphi 0, %s151
      %s154 = sphi 0, %s153
      %s168 = sphi 0, %s154
      %s172 = sphi 0, %s172
      %s174 = sphi 0, %s172
      %s175 = sphi 0, %s174
      %s189 = sphi 0, %s175
      %s197 = sphi 0, %s199
      %s200 = sphi 0, %s197
      %s201 = sphi 0, %s200
      %s217 = sphi 0, %s201
      %s225 = sphi 0, %s227
      %s228 = sphi 0, %s225
      %s229 = sphi 0, %s228
      %s245 = sphi 0, %s229
    $region4: #{tpu_custom_call.1} parent=1 // loop_header_branch
      %24 = sbr.rel (%p22) target = $region8
    $region5: #{tpu_custom_call.1} parent=1 // loop_body
      %s26 = ssub.s32 %s21, 1
      %s27 = ssub.s32 %s21, 2
      %s34 = sadd.s32 1, %s29
      %p35 = scmp.ge.s32.totalorder %s34, 1
      %s36 = scalar_select %p35, 0, %s34
      %s37 = sadd.s32 1, %s28
      %s38 = scalar_select %p35, %s37, %s28
      %p39 = scmp.ge.s32.totalorder %s38, 2
      %s40 = scalar_select %p39, 0, %s38
      %s41 = ssub.s32 %s28, %s40
      %p42 = scmp.eq.s32.totalorder %s41, 0
      %s44 = sadd.s32 %s43, 1
      %s45 = scalar_select %p42, %s43, %s44
      %p48 = pneg %p42
      %p49 = scmp.eq.s32.totalorder %s21, 1
      %p50 = por %p48, %p49
      %p51 = scmp.ne.s32.totalorder %s43, %s46
      %p52 = scmp.eq.s32.totalorder %s21, 0
      %p53 = por %p51, %p52
      %p54 = scmp.ne.s32.totalorder %s43, %s46
      %p55 = scmp.eq.s32.totalorder %s26, 1
      %p56 = por %p54, %p55
      %p57 = scmp.ne.s32.totalorder %s46, %s47
      %p58 = scmp.eq.s32.totalorder %s26, 0
      %p59 = por %p57, %p58
      %p60 = scmp.ne.s32.totalorder %s46, %s47
      %p61 = scmp.eq.s32.totalorder %s27, 1
      %p62 = por %p60, %p61
      %p64 = scmp.ne.s32.totalorder %s47, %s63
      %p65 = scmp.eq.s32.totalorder %s27, 0
      %p66 = por %p64, %p65
      %s68 = sadd.s32 %s67, 1
      %p71 = scmp.eq.s32.totalorder %s21, 1
      %p72 = scmp.ne.s32.totalorder %s67, %s69
      %p73 = scmp.eq.s32.totalorder %s21, 0
      %p74 = por %p72, %p73
      %p75 = scmp.ne.s32.totalorder %s67, %s69
      %p76 = scmp.eq.s32.totalorder %s26, 1
      %p77 = por %p75, %p76
      %p78 = scmp.ne.s32.totalorder %s69, %s70
      %p79 = scmp.eq.s32.totalorder %s26, 0
      %p80 = por %p78, %p79
      %p81 = scmp.ne.s32.totalorder %s69, %s70
      %p82 = scmp.eq.s32.totalorder %s27, 1
      %p83 = por %p81, %p82
      %p85 = scmp.ne.s32.totalorder %s70, %s84
      %p86 = scmp.eq.s32.totalorder %s27, 0
      %p87 = por %p85, %p86
      %s89 = sadd.s32 %s88, 1
      %p92 = scmp.eq.s32.totalorder %s21, 1
      %p93 = scmp.ne.s32.totalorder %s88, %s90
      %p94 = scmp.eq.s32.totalorder %s21, 0
      %p95 = por %p93, %p94
      %p96 = scmp.ne.s32.totalorder %s88, %s90
      %p97 = scmp.eq.s32.totalorder %s26, 1
      %p98 = por %p96, %p97
      %p99 = scmp.ne.s32.totalorder %s90, %s91
      %p100 = scmp.eq.s32.totalorder %s26, 0
      %p101 = por %p99, %p100
      %p102 = scmp.ne.s32.totalorder %s90, %s91
      %p103 = scmp.eq.s32.totalorder %s27, 1
      %p104 = por %p102, %p103
      %p106 = scmp.ne.s32.totalorder %s91, %s105
      %p107 = scmp.eq.s32.totalorder %s27, 0
      %p108 = por %p106, %p107
      %s110 = sadd.s32 %s109, 1
      %p113 = scmp.eq.s32.totalorder %s21, 1
      %p114 = scmp.ne.s32.totalorder %s109, %s111
      %p115 = scmp.eq.s32.totalorder %s21, 0
      %p116 = por %p114, %p115
      %p117 = scmp.ne.s32.totalorder %s109, %s111
      %p118 = scmp.eq.s32.totalorder %s26, 1
      %p119 = por %p117, %p118
      %p120 = scmp.ne.s32.totalorder %s111, %s112
      %p121 = scmp.eq.s32.totalorder %s26, 0
      %p122 = por %p120, %p121
      %p123 = scmp.ne.s32.totalorder %s111, %s112
      %p124 = scmp.eq.s32.totalorder %s27, 1
      %p125 = por %p123, %p124
      %p127 = scmp.ne.s32.totalorder %s112, %s126
      %p128 = scmp.eq.s32.totalorder %s27, 0
      %p129 = por %p127, %p128
      %s131 = sadd.s32 %s130, 1
      %p134 = scmp.eq.s32.totalorder %s21, 1
      %p135 = scmp.ne.s32.totalorder %s130, %s132
      %p136 = scmp.eq.s32.totalorder %s21, 0
      %p137 = por %p135, %p136
      %p138 = scmp.ne.s32.totalorder %s130, %s132
      %p139 = scmp.eq.s32.totalorder %s26, 1
      %p140 = por %p138, %p139
      %p141 = scmp.ne.s32.totalorder %s132, %s133
      %p142 = scmp.eq.s32.totalorder %s26, 0
      %p143 = por %p141, %p142
      %p144 = scmp.ne.s32.totalorder %s132, %s133
      %p145 = scmp.eq.s32.totalorder %s27, 1
      %p146 = por %p144, %p145
      %p148 = scmp.ne.s32.totalorder %s133, %s147
      %p149 = scmp.eq.s32.totalorder %s27, 0
      %p150 = por %p148, %p149
      %s152 = sadd.s32 %s151, 1
      %p155 = scmp.eq.s32.totalorder %s21, 1
      %p156 = scmp.ne.s32.totalorder %s151, %s153
      %p157 = scmp.eq.s32.totalorder %s21, 0
      %p158 = por %p156, %p157
      %p159 = scmp.ne.s32.totalorder %s151, %s153
      %p160 = scmp.eq.s32.totalorder %s26, 1
      %p161 = por %p159, %p160
      %p162 = scmp.ne.s32.totalorder %s153, %s154
      %p163 = scmp.eq.s32.totalorder %s26, 0
      %p164 = por %p162, %p163
      %p165 = scmp.ne.s32.totalorder %s153, %s154
      %p166 = scmp.eq.s32.totalorder %s27, 1
      %p167 = por %p165, %p166
      %p169 = scmp.ne.s32.totalorder %s154, %s168
      %p170 = scmp.eq.s32.totalorder %s27, 0
      %p171 = por %p169, %p170
      %s173 = sadd.s32 %s172, 1
      %p176 = scmp.eq.s32.totalorder %s21, 1
      %p177 = scmp.ne.s32.totalorder %s172, %s174
      %p178 = scmp.eq.s32.totalorder %s21, 0
      %p179 = por %p177, %p178
      %p180 = scmp.ne.s32.totalorder %s172, %s174
      %p181 = scmp.eq.s32.totalorder %s26, 1
      %p182 = por %p180, %p181
      %p183 = scmp.ne.s32.totalorder %s174, %s175
      %p184 = scmp.eq.s32.totalorder %s26, 0
      %p185 = por %p183, %p184
      %p186 = scmp.ne.s32.totalorder %s174, %s175
      %p187 = scmp.eq.s32.totalorder %s27, 1
      %p188 = por %p186, %p187
      %p190 = scmp.ne.s32.totalorder %s175, %s189
      %p191 = scmp.eq.s32.totalorder %s27, 0
      %p192 = por %p190, %p191
      %s193 = ssub.s32 %s28, %s40
      %s194 = ssub.s32 %s29, %s36
      %s195 = sor.u32 %s193, %s194
      %p196 = scmp.eq.s32.totalorder %s195, 0
      %s198 = sadd.s32 %s197, 1
      %s199 = scalar_select %p196, %s197, %s198
      %p202 = pneg %p196
      %p203 = scmp.eq.s32.totalorder %s21, 1
      %p204 = por %p202, %p203
      %p205 = scmp.ne.s32.totalorder %s197, %s200
      %p206 = scmp.eq.s32.totalorder %s21, 0
      %p207 = por %p205, %p206
      %p208 = scmp.ne.s32.totalorder %s197, %s200
      %p209 = scmp.eq.s32.totalorder %s26, 1
      %p210 = por %p208, %p209
      %p211 = scmp.ne.s32.totalorder %s200, %s201
      %p212 = scmp.eq.s32.totalorder %s26, 0
      %p213 = por %p211, %p212
      %p214 = scmp.ne.s32.totalorder %s200, %s201
      %p215 = scmp.eq.s32.totalorder %s27, 1
      %p216 = por %p214, %p215
      %p218 = scmp.ne.s32.totalorder %s201, %s217
      %p219 = scmp.eq.s32.totalorder %s27, 0
      %p220 = por %p218, %p219
      %s221 = ssub.s32 %s28, %s40
      %s222 = ssub.s32 %s29, %s36
      %s223 = sor.u32 %s221, %s222
      %p224 = scmp.eq.s32.totalorder %s223, 0
      %s226 = sadd.s32 %s225, 1
      %s227 = scalar_select %p224, %s225, %s226
      %p230 = pneg %p224
      %p231 = scmp.eq.s32.totalorder %s21, 1
      %p232 = por %p230, %p231
      %p233 = scmp.ne.s32.totalorder %s225, %s228
      %p234 = scmp.eq.s32.totalorder %s21, 0
      %p235 = por %p233, %p234
      %p236 = scmp.ne.s32.totalorder %s225, %s228
      %p237 = scmp.eq.s32.totalorder %s26, 1
      %p238 = por %p236, %p237
      %p239 = scmp.ne.s32.totalorder %s228, %s229
      %p240 = scmp.eq.s32.totalorder %s26, 0
      %p241 = por %p239, %p240
      %p242 = scmp.ne.s32.totalorder %s228, %s229
      %p243 = scmp.eq.s32.totalorder %s27, 1
      %p244 = por %p242, %p243
      %p246 = scmp.ne.s32.totalorder %s229, %s245
      %p247 = scmp.eq.s32.totalorder %s27, 0
      %p248 = por %p246, %p247
      %p249 = scmp.le.s32.totalorder 1, %s21
      %p250 = scmp.lt.s32.totalorder %s21, 3
      %p251 = pnand %p249, %p250
      %p252 = pneg %p251
      // Predicated region
      $region9: #{tpu_custom_call.1} parent=5 // pred_check
        _
      $region10: #{tpu_custom_call.1} parent=5 // pred_check_branch
        %254 = sbr.rel (%p251) target = $region12
      $region11: #{tpu_custom_call.1} parent=5 // pred_region
        %s255 = ssub.s32 %s21, 1
        // Predicated region
        $region13: #{tpu_custom_call.1} parent=11 // pred_check
          %p256 = pneg %p80
        $region14: #{tpu_custom_call.1} parent=11 // pred_check_branch
          %258 = sbr.rel (%p256) target = $region16
        $region15: #{tpu_custom_call.1} parent=11 // pred_region
          _
        $region16: #{tpu_custom_call.1} parent=11 // pred_fallthru
          _
        // Predicated region
        $region17: #{tpu_custom_call.1} parent=11 // pred_check
          %p259 = pneg %p101
        $region18: #{tpu_custom_call.1} parent=11 // pred_check_branch
          %261 = sbr.rel (%p259) target = $region20
        $region19: #{tpu_custom_call.1} parent=11 // pred_region
          _
        $region20: #{tpu_custom_call.1} parent=11 // pred_fallthru
          _
        // Predicated region
        $region21: #{tpu_custom_call.1} parent=11 // pred_check
          %p262 = pneg %p122
        $region22: #{tpu_custom_call.1} parent=11 // pred_check_branch
          %264 = sbr.rel (%p262) target = $region24
        $region23: #{tpu_custom_call.1} parent=11 // pred_region
          _
        $region24: #{tpu_custom_call.1} parent=11 // pred_fallthru
          _
        // Predicated region
        $region25: #{tpu_custom_call.1} parent=11 // pred_check
          %p265 = pneg %p143
        $region26: #{tpu_custom_call.1} parent=11 // pred_check_branch
          %267 = sbr.rel (%p265) target = $region28
        $region27: #{tpu_custom_call.1} parent=11 // pred_region
          _
        $region28: #{tpu_custom_call.1} parent=11 // pred_fallthru
          _
        // Predicated region
        $region29: #{tpu_custom_call.1} parent=11 // pred_check
          %p268 = pneg %p164
        $region30: #{tpu_custom_call.1} parent=11 // pred_check_branch
          %270 = sbr.rel (%p268) target = $region32
        $region31: #{tpu_custom_call.1} parent=11 // pred_region
          _
        $region32: #{tpu_custom_call.1} parent=11 // pred_fallthru
          _
        // Predicated region
        $region33: #{tpu_custom_call.1} parent=11 // pred_check
          %p271 = pneg %p185
        $region34: #{tpu_custom_call.1} parent=11 // pred_check_branch
          %273 = sbr.rel (%p271) target = $region36
        $region35: #{tpu_custom_call.1} parent=11 // pred_region
          _
        $region36: #{tpu_custom_call.1} parent=11 // pred_fallthru
          _
      $region12: #{tpu_custom_call.1} parent=5 // pred_fallthru
        _
      %p274 = scmp.lt.s32.totalorder %s21, 2
      // Predicated region
      $region37: #{tpu_custom_call.1} parent=5 // pred_check
        %p275 = pneg %p274
      $region38: #{tpu_custom_call.1} parent=5 // pred_check_branch
        %277 = sbr.rel (%p275) target = $region40
      $region39: #{tpu_custom_call.1} parent=5 // pred_region
        // Predicated region
        $region41: #{tpu_custom_call.1} parent=39 // pred_check
          %p278 = pneg %p53
        $region42: #{tpu_custom_call.1} parent=39 // pred_check_branch
          %280 = sbr.rel (%p278) target = $region44
        $region43: #{tpu_custom_call.1} parent=39 // pred_region
          %p281 = scmp.lt.s32.totalorder %s28, 1
          %s282 = scalar_select %p281, %s28, 1
          %s283 = smul.addr %s282, 8
          %s284 = scalar_lea.vmem %s0, %s283
        $region44: #{tpu_custom_call.1} parent=39 // pred_fallthru
          _
      $region40: #{tpu_custom_call.1} parent=5 // pred_fallthru
        _
      %p285 = scmp.le.s32.totalorder 1, %s21
      %p286 = scmp.lt.s32.totalorder %s21, 3
      %p287 = pnand %p285, %p286
      %p288 = pneg %p287
      // Predicated region
      $region45: #{tpu_custom_call.1} parent=5 // pred_check
        _
      $region46: #{tpu_custom_call.1} parent=5 // pred_check_branch
        %290 = sbr.rel (%p287) target = $region48
      $region47: #{tpu_custom_call.1} parent=5 // pred_region
        %s291 = ssub.s32 %s21, 1
        %p292 = scmp.lt.s32.totalorder %s30, 1
        %s293 = scalar_select %p292, %s30, 1
        %s294 = smul.addr %s293, 8
        %s295 = scalar_lea.vmem %s0, %s294
        %p296 = pneg %p59
        %p297 = pneg %p56
        %p298 = pneg %p80
        %p299 = pneg %p77
        %p300 = pneg %p101
        %p301 = pneg %p98
        %p302 = pneg %p122
        %p303 = pneg %p119
        %p304 = pneg %p143
        %p305 = pneg %p140
        %p306 = pneg %p164
        %p307 = pneg %p161
        %p308 = pneg %p185
        %p309 = pneg %p182
        %p310 = pneg %p213
        %p311 = pneg %p210
        %s312 = sand.u32 %s200, 1
        %s313 = scalar_lea.sflag [#allocation5], %s312
        %s314 = sand.u32 %s200, 1
        %s315 = smul.addr %s314, 8
        %s316 = scalar_lea.vmem [#allocation4], %s315
        %p317 = pneg %p241
        %p318 = pneg %p238
        %s319 = sand.u32 %s228, 1
        %s320 = scalar_lea.sflag [#allocation7], %s319
        %s321 = sand.u32 %s228, 1
        %s322 = smul.addr %s321, 8
        %s323 = scalar_lea.vmem [#allocation6], %s322
        %p324 = scmp.lt.s32.totalorder %s30, 1
        %s325 = scalar_select %p324, %s30, 1
        %s326 = smul.addr %s325, 8
        %s327 = scalar_lea.vmem %s0, %s326
        %p328 = scmp.eq.s32.totalorder %s31, 0
        // Predicated region
        $region49: #{tpu_custom_call.1} parent=47 // pred_check
          %p329 = pneg %p328
        $region50: #{tpu_custom_call.1} parent=47 // pred_check_branch
          %331 = sbr.rel (%p329) target = $region52
        $region51: #{tpu_custom_call.1} parent=47 // pred_region
          %v332 = vld [vmem:[%s327] sm:$0xff]
          %v333 = vld [vmem:[%s3] sm:$0xff]
          %v334 = vld [vmem:[%s3 + $0x8] sm:$0xff]
          %v335 = vld [vmem:[%s3 + $0x10] sm:$0xff]
          %v336 = vld [vmem:[%s3 + $0x18] sm:$0xff]
          %v337 = vld [vmem:[%s4] sm:$0x1]
          %v339 = vlaneseq
          %v340 = vshrl.u32 %v339, 7
          %v341 = vsub.s32 0, %v340
          %v342 = vrot.slane %v337, %v341
          %vm344 = vcmask 261120
          %v346 = vsel %vm344, %v332, 0
          %348 = vmatprep.subr.mxu0 0.0
          %349 = vmatpush1.msra.mxu0 %v333
          %350 = vmatprep.subr.mxu0 0.0
          %351 = vmatpush1.msra.mxu0 %v334
          %352 = vmatprep.subr.mxu0 0.0
          %353 = vmatpush1.msra.mxu0 %v335
          %354 = vmatprep.subr.mxu0 0.0
          %355 = vmatpush1.msra.mxu0 %v336
          %356 = vmatprep.subr.mxu0 0.0
          %357 = vmatpush1.msra.mxu0 0.0
          %358 = vmatprep.subr.mxu0 0.0
          %359 = vmatpush1.msra.mxu0 0.0
          %360 = vmatprep.subr.mxu0 0.0
          %361 = vmatpush1.msra.mxu0 0.0
          %362 = vmatprep.subr.mxu0 0.0
          %363 = vmatpush1.msra.mxu0 0.0
          %364 = vmatprep.subr.mxu0 0.0
          %365 = vmatpush1.msra.mxu0 0.0
          %366 = vmatprep.subr.mxu0 0.0
          %367 = vmatpush1.msra.mxu0 0.0
          %368 = vmatprep.subr.mxu0 0.0
          %369 = vmatpush1.msra.mxu0 0.0
          %370 = vmatprep.subr.mxu0 0.0
          %371 = vmatpush1.msra.mxu0 0.0
          %372 = vmatprep.subr.mxu0 0.0
          %373 = vmatpush1.msra.mxu0 0.0
          %374 = vmatprep.subr.mxu0 0.0
          %375 = vmatpush1.msra.mxu0 0.0
          %376 = vmatprep.subr.mxu0 0.0
          %377 = vmatpush1.msra.mxu0 0.0
          %378 = vmatprep.subr.mxu0 0.0
          %379 = vmatpush1.msra.mxu0 0.0
          %380 = vmatprep.subr.mxu0 0.0
          %381 = vmatpush1.msra.mxu0 0.0
          %382 = vmatprep.subr.mxu0 0.0
          %383 = vmatpush1.msra.mxu0 0.0
          %384 = vmatprep.subr.mxu0 0.0
          %385 = vmatpush1.msra.mxu0 0.0
          %386 = vmatprep.subr.mxu0 0.0
          %387 = vmatpush1.msra.mxu0 0.0
          %388 = vmatprep.subr.mxu0 0.0
          %389 = vmatpush1.msra.mxu0 0.0
          %390 = vmatprep.subr.mxu0 0.0
          %391 = vmatpush1.msra.mxu0 0.0
          %392 = vmatprep.subr.mxu0 0.0
          %393 = vmatpush1.msra.mxu0 0.0
          %394 = vmatprep.subr.mxu0 0.0
          %395 = vmatpush1.msra.mxu0 0.0
          %396 = vmatprep.subr.mxu0 0.0
          %397 = vmatpush1.msra.mxu0 0.0
          %398 = vmatprep.subr.mxu0 0.0
          %399 = vmatpush1.msra.mxu0 0.0
          %400 = vmatprep.subr.mxu0 0.0
          %401 = vmatpush1.msra.mxu0 0.0
          %402 = vmatprep.subr.mxu0 0.0
          %403 = vmatpush1.msra.mxu0 0.0
          %404 = vmatprep.subr.mxu0 0.0
          %405 = vmatpush1.msra.mxu0 0.0
          %406 = vmatprep.subr.mxu0 0.0
          %407 = vmatpush1.msra.mxu0 0.0
          %408 = vmatprep.subr.mxu0 0.0
          %409 = vmatpush1.msra.mxu0 0.0
          %410 = vmatprep.subr.mxu0 0.0
          %411 = vmatpush1.msra.mxu0 0.0
          %412 = vmatprep.mubr.f32.mxu0 0.0
          %413 = vmatmul.mubr.f32.gmra.mrb[0].mxu0 %v346
          %v414 = vpop.f32.mrb[0].mxu0
          %v415 = vadd.f32 %v342, %v414
          %v416 = vpop.f32.mrb[0].mxu0
          %417 = vdwg.mxu0
          %v418 = vld [vmem:[%s5] sm:$0xff]
          %v419 = vld [vmem:[%s5 + $0x8] sm:$0xff]
          %v420 = vld [vmem:[%s5 + $0x10] sm:$0xff]
          %v421 = vld [vmem:[%s5 + $0x18] sm:$0xff]
          %v422 = vld [vmem:[%s6] sm:$0x1]
          %v424 = vlaneseq
          %v425 = vshrl.u32 %v424, 7
          %v426 = vsub.s32 0, %v425
          %v427 = vrot.slane %v422, %v426
          %429 = vmatprep.subr.mxu0 0.0
          %430 = vmatpush1.msra.mxu0 %v418
          %431 = vmatprep.subr.mxu0 0.0
          %432 = vmatpush1.msra.mxu0 %v419
          %433 = vmatprep.subr.mxu0 0.0
          %434 = vmatpush1.msra.mxu0 %v420
          %435 = vmatprep.subr.mxu0 0.0
          %436 = vmatpush1.msra.mxu0 %v421
          %437 = vmatprep.subr.mxu0 0.0
          %438 = vmatpush1.msra.mxu0 0.0
          %439 = vmatprep.subr.mxu0 0.0
          %440 = vmatpush1.msra.mxu0 0.0
          %441 = vmatprep.subr.mxu0 0.0
          %442 = vmatpush1.msra.mxu0 0.0
          %443 = vmatprep.subr.mxu0 0.0
          %444 = vmatpush1.msra.mxu0 0.0
          %445 = vmatprep.subr.mxu0 0.0
          %446 = vmatpush1.msra.mxu0 0.0
          %447 = vmatprep.subr.mxu0 0.0
          %448 = vmatpush1.msra.mxu0 0.0
          %449 = vmatprep.subr.mxu0 0.0
          %450 = vmatpush1.msra.mxu0 0.0
          %451 = vmatprep.subr.mxu0 0.0
          %452 = vmatpush1.msra.mxu0 0.0
          %453 = vmatprep.subr.mxu0 0.0
          %454 = vmatpush1.msra.mxu0 0.0
          %455 = vmatprep.subr.mxu0 0.0
          %456 = vmatpush1.msra.mxu0 0.0
          %457 = vmatprep.subr.mxu0 0.0
          %458 = vmatpush1.msra.mxu0 0.0
          %459 = vmatprep.subr.mxu0 0.0
          %460 = vmatpush1.msra.mxu0 0.0
          %461 = vmatprep.subr.mxu0 0.0
          %462 = vmatpush1.msra.mxu0 0.0
          %463 = vmatprep.subr.mxu0 0.0
          %464 = vmatpush1.msra.mxu0 0.0
          %465 = vmatprep.subr.mxu0 0.0
          %466 = vmatpush1.msra.mxu0 0.0
          %467 = vmatprep.subr.mxu0 0.0
          %468 = vmatpush1.msra.mxu0 0.0
          %469 = vmatprep.subr.mxu0 0.0
          %470 = vmatpush1.msra.mxu0 0.0
          %471 = vmatprep.subr.mxu0 0.0
          %472 = vmatpush1.msra.mxu0 0.0
          %473 = vmatprep.subr.mxu0 0.0
          %474 = vmatpush1.msra.mxu0 0.0
          %475 = vmatprep.subr.mxu0 0.0
          %476 = vmatpush1.msra.mxu0 0.0
          %477 = vmatprep.subr.mxu0 0.0
          %478 = vmatpush1.msra.mxu0 0.0
          %479 = vmatprep.subr.mxu0 0.0
          %480 = vmatpush1.msra.mxu0 0.0
          %481 = vmatprep.subr.mxu0 0.0
          %482 = vmatpush1.msra.mxu0 0.0
          %483 = vmatprep.subr.mxu0 0.0
          %484 = vmatpush1.msra.mxu0 0.0
          %485 = vmatprep.subr.mxu0 0.0
          %486 = vmatpush1.msra.mxu0 0.0
          %487 = vmatprep.subr.mxu0 0.0
          %488 = vmatpush1.msra.mxu0 0.0
          %489 = vmatprep.subr.mxu0 0.0
          %490 = vmatpush1.msra.mxu0 0.0
          %491 = vmatprep.subr.mxu0 0.0
          %492 = vmatpush1.msra.mxu0 0.0
          %493 = vmatprep.mubr.f32.mxu0 0.0
          %494 = vmatmul.mubr.f32.gmra.mrb[0].mxu0 %v346
          %v495 = vpop.f32.mrb[0].mxu0
          %v496 = vadd.f32 %v427, %v495
          %v497 = vpop.f32.mrb[0].mxu0
          %498 = vdwg.mxu0
          %vm499 = vcmask 130048
          %500 = vst.msk [vmem:[#allocation2] sm:$0xff] %vm499, %v415
          %501 = vst.msk [vmem:[#allocation3] sm:$0xff] %vm499, %v496
        $region52: #{tpu_custom_call.1} parent=47 // pred_fallthru
          _
        %v502 = vld [vmem:[%s327] sm:$0xff]
        %v503 = vld [vmem:[%s1] sm:$0xff]
        %v504 = vld [vmem:[%s1 + $0x8] sm:$0xff]
        %v505 = vld [vmem:[%s1 + $0x10] sm:$0xff]
        %v506 = vld [vmem:[%s1 + $0x18] sm:$0xff]
        %v507 = vld [vmem:[%s2] sm:$0x1]
        %v509 = vlaneseq
        %v510 = vshrl.u32 %v509, 7
        %v511 = vsub.s32 0, %v510
        %v512 = vrot.slane %v507, %v511
        %vm514 = vcmask 261120
        %v516 = vsel %vm514, %v502, 0
        %518 = vmatprep.subr.mxu0 0.0
        %519 = vmatpush1.msra.mxu0 %v503
        %520 = vmatprep.subr.mxu0 0.0
        %521 = vmatpush1.msra.mxu0 %v504
        %522 = vmatprep.subr.mxu0 0.0
        %523 = vmatpush1.msra.mxu0 %v505
        %524 = vmatprep.subr.mxu0 0.0
        %525 = vmatpush1.msra.mxu0 %v506
        %526 = vmatprep.subr.mxu0 0.0
        %527 = vmatpush1.msra.mxu0 0.0
        %528 = vmatprep.subr.mxu0 0.0
        %529 = vmatpush1.msra.mxu0 0.0
        %530 = vmatprep.subr.mxu0 0.0
        %531 = vmatpush1.msra.mxu0 0.0
        %532 = vmatprep.subr.mxu0 0.0
        %533 = vmatpush1.msra.mxu0 0.0
        %534 = vmatprep.subr.mxu0 0.0
        %535 = vmatpush1.msra.mxu0 0.0
        %536 = vmatprep.subr.mxu0 0.0
        %537 = vmatpush1.msra.mxu0 0.0
        %538 = vmatprep.subr.mxu0 0.0
        %539 = vmatpush1.msra.mxu0 0.0
        %540 = vmatprep.subr.mxu0 0.0
        %541 = vmatpush1.msra.mxu0 0.0
        %542 = vmatprep.subr.mxu0 0.0
        %543 = vmatpush1.msra.mxu0 0.0
        %544 = vmatprep.subr.mxu0 0.0
        %545 = vmatpush1.msra.mxu0 0.0
        %546 = vmatprep.subr.mxu0 0.0
        %547 = vmatpush1.msra.mxu0 0.0
        %548 = vmatprep.subr.mxu0 0.0
        %549 = vmatpush1.msra.mxu0 0.0
        %550 = vmatprep.subr.mxu0 0.0
        %551 = vmatpush1.msra.mxu0 0.0
        %552 = vmatprep.subr.mxu0 0.0
        %553 = vmatpush1.msra.mxu0 0.0
        %554 = vmatprep.subr.mxu0 0.0
        %555 = vmatpush1.msra.mxu0 0.0
        %556 = vmatprep.subr.mxu0 0.0
        %557 = vmatpush1.msra.mxu0 0.0
        %558 = vmatprep.subr.mxu0 0.0
        %559 = vmatpush1.msra.mxu0 0.0
        %560 = vmatprep.subr.mxu0 0.0
        %561 = vmatpush1.msra.mxu0 0.0
        %562 = vmatprep.subr.mxu0 0.0
        %563 = vmatpush1.msra.mxu0 0.0
        %564 = vmatprep.subr.mxu0 0.0
        %565 = vmatpush1.msra.mxu0 0.0
        %566 = vmatprep.subr.mxu0 0.0
        %567 = vmatpush1.msra.mxu0 0.0
        %568 = vmatprep.subr.mxu0 0.0
        %569 = vmatpush1.msra.mxu0 0.0
        %570 = vmatprep.subr.mxu0 0.0
        %571 = vmatpush1.msra.mxu0 0.0
        %572 = vmatprep.subr.mxu0 0.0
        %573 = vmatpush1.msra.mxu0 0.0
        %574 = vmatprep.subr.mxu0 0.0
        %575 = vmatpush1.msra.mxu0 0.0
        %576 = vmatprep.subr.mxu0 0.0
        %577 = vmatpush1.msra.mxu0 0.0
        %578 = vmatprep.subr.mxu0 0.0
        %579 = vmatpush1.msra.mxu0 0.0
        %580 = vmatprep.subr.mxu0 0.0
        %581 = vmatpush1.msra.mxu0 0.0
        %582 = vmatprep.mubr.f32.mxu0 0.0
        %583 = vmatmul.mubr.f32.gmra.mrb[0].mxu0 %v516
        %v584 = vpop.f32.mrb[0].mxu0
        %v585 = vadd.f32 %v512, %v584
        %v586 = vpop.f32.mrb[0].mxu0
        %587 = vdwg.mxu0
        %v588 = vld [vmem:[#allocation2] sm:$0xff]
        %v589 = vld [vmem:[#allocation3] sm:$0xff]
        %vm590 = vcmask 130048
        %v592 = vsel %vm590, %v585, 0
        %v595 = vsel %vm590, %v588, 0
        %597 = vmatprep.subr.mxu0 0.0
        %598 = vmatpush1.xpose.msra.mxu0 %v595
        %599 = vmatprep.subr.mxu0 0.0
        %600 = vmatpush1.xpose.msra.mxu0 0.0
        %601 = vmatprep.subr.mxu0 0.0
        %602 = vmatpush1.xpose.msra.mxu0 0.0
        %603 = vmatprep.subr.mxu0 0.0
        %604 = vmatpush1.xpose.msra.mxu0 0.0
        %605 = vmatprep.subr.mxu0 0.0
        %606 = vmatpush1.xpose.msra.mxu0 0.0
        %607 = vmatprep.subr.mxu0 0.0
        %608 = vmatpush1.xpose.msra.mxu0 0.0
        %609 = vmatprep.subr.mxu0 0.0
        %610 = vmatpush1.xpose.msra.mxu0 0.0
        %611 = vmatprep.subr.mxu0 0.0
        %612 = vmatpush1.xpose.msra.mxu0 0.0
        %613 = vmatprep.subr.mxu0 0.0
        %614 = vmatpush1.xpose.msra.mxu0 0.0
        %615 = vmatprep.subr.mxu0 0.0
        %616 = vmatpush1.xpose.msra.mxu0 0.0
        %617 = vmatprep.subr.mxu0 0.0
        %618 = vmatpush1.xpose.msra.mxu0 0.0
        %619 = vmatprep.subr.mxu0 0.0
        %620 = vmatpush1.xpose.msra.mxu0 0.0
        %621 = vmatprep.subr.mxu0 0.0
        %622 = vmatpush1.xpose.msra.mxu0 0.0
        %623 = vmatprep.subr.mxu0 0.0
        %624 = vmatpush1.xpose.msra.mxu0 0.0
        %625 = vmatprep.subr.mxu0 0.0
        %626 = vmatpush1.xpose.msra.mxu0 0.0
        %627 = vmatprep.subr.mxu0 0.0
        %628 = vmatpush1.xpose.msra.mxu0 0.0
        %629 = vmatprep.subr.mxu0 0.0
        %630 = vmatpush1.xpose.msra.mxu0 0.0
        %631 = vmatprep.subr.mxu0 0.0
        %632 = vmatpush1.xpose.msra.mxu0 0.0
        %633 = vmatprep.subr.mxu0 0.0
        %634 = vmatpush1.xpose.msra.mxu0 0.0
        %635 = vmatprep.subr.mxu0 0.0
        %636 = vmatpush1.xpose.msra.mxu0 0.0
        %637 = vmatprep.subr.mxu0 0.0
        %638 = vmatpush1.xpose.msra.mxu0 0.0
        %639 = vmatprep.subr.mxu0 0.0
        %640 = vmatpush1.xpose.msra.mxu0 0.0
        %641 = vmatprep.subr.mxu0 0.0
        %642 = vmatpush1.xpose.msra.mxu0 0.0
        %643 = vmatprep.subr.mxu0 0.0
        %644 = vmatpush1.xpose.msra.mxu0 0.0
        %645 = vmatprep.subr.mxu0 0.0
        %646 = vmatpush1.xpose.msra.mxu0 0.0
        %647 = vmatprep.subr.mxu0 0.0
        %648 = vmatpush1.xpose.msra.mxu0 0.0
        %649 = vmatprep.subr.mxu0 0.0
        %650 = vmatpush1.xpose.msra.mxu0 0.0
        %651 = vmatprep.subr.mxu0 0.0
        %652 = vmatpush1.xpose.msra.mxu0 0.0
        %653 = vmatprep.subr.mxu0 0.0
        %654 = vmatpush1.xpose.msra.mxu0 0.0
        %655 = vmatprep.subr.mxu0 0.0
        %656 = vmatpush1.xpose.msra.mxu0 0.0
        %657 = vmatprep.subr.mxu0 0.0
        %658 = vmatpush1.xpose.msra.mxu0 0.0
        %659 = vmatprep.subr.mxu0 0.0
        %660 = vmatpush1.xpose.msra.mxu0 0.0
        %661 = vmatprep.mubr.f32.mxu0 0.0
        %662 = vmatmul.mubr.f32.gmra.mrb[0].mxu0 %v592
        %v663 = vpop.f32.mrb[0].mxu0
        %v664 = vadd.f32 0.0, %v663
        %v665 = vpop.f32.mrb[0].mxu0
        %666 = vdwg.mxu0
        %vm667 = vcmask 64512
        %v668 = vsel %vm667, %v664, -inf
        %669 = vmax.xlane.f32.xlu0 %v668
        %v670 = vpop.xlane.xlu0 %669
        %v671 = vsub.f32 %v664, %v670
        %v672 = vmul.f32 %v671, 1.442695
        %v673 = vpow.pop %v672
        %v674 = vsel %vm667, %v673, 0.0
        %675 = vadd.xlane.f32.xlu0 %v674
        %v676 = vpop.xlane.xlu0 %675
        %v677 = vrcp.pop %v676
        %v678 = vmul.f32 %v673, %v677
        %v680 = vsel %vm667, %v678, 0
        %682 = vmatprep.subr.mxu0 0.0
        %683 = vmatpush1.msra.mxu0 %v589
        %684 = vmatprep.subr.mxu0 0.0
        %685 = vmatpush1.msra.mxu0 0.0
        %686 = vmatprep.subr.mxu0 0.0
        %687 = vmatpush1.msra.mxu0 0.0
        %688 = vmatprep.subr.mxu0 0.0
        %689 = vmatpush1.msra.mxu0 0.0
        %690 = vmatprep.subr.mxu0 0.0
        %691 = vmatpush1.msra.mxu0 0.0
        %692 = vmatprep.subr.mxu0 0.0
        %693 = vmatpush1.msra.mxu0 0.0
        %694 = vmatprep.subr.mxu0 0.0
        %695 = vmatpush1.msra.mxu0 0.0
        %696 = vmatprep.subr.mxu0 0.0
        %697 = vmatpush1.msra.mxu0 0.0
        %698 = vmatprep.subr.mxu0 0.0
        %699 = vmatpush1.msra.mxu0 0.0
        %700 = vmatprep.subr.mxu0 0.0
        %701 = vmatpush1.msra.mxu0 0.0
        %702 = vmatprep.subr.mxu0 0.0
        %703 = vmatpush1.msra.mxu0 0.0
        %704 = vmatprep.subr.mxu0 0.0
        %705 = vmatpush1.msra.mxu0 0.0
        %706 = vmatprep.subr.mxu0 0.0
        %707 = vmatpush1.msra.mxu0 0.0
        %708 = vmatprep.subr.mxu0 0.0
        %709 = vmatpush1.msra.mxu0 0.0
        %710 = vmatprep.subr.mxu0 0.0
        %711 = vmatpush1.msra.mxu0 0.0
        %712 = vmatprep.subr.mxu0 0.0
        %713 = vmatpush1.msra.mxu0 0.0
        %714 = vmatprep.subr.mxu0 0.0
        %715 = vmatpush1.msra.mxu0 0.0
        %716 = vmatprep.subr.mxu0 0.0
        %717 = vmatpush1.msra.mxu0 0.0
        %718 = vmatprep.subr.mxu0 0.0
        %719 = vmatpush1.msra.mxu0 0.0
        %720 = vmatprep.subr.mxu0 0.0
        %721 = vmatpush1.msra.mxu0 0.0
        %722 = vmatprep.subr.mxu0 0.0
        %723 = vmatpush1.msra.mxu0 0.0
        %724 = vmatprep.subr.mxu0 0.0
        %725 = vmatpush1.msra.mxu0 0.0
        %726 = vmatprep.subr.mxu0 0.0
        %727 = vmatpush1.msra.mxu0 0.0
        %728 = vmatprep.subr.mxu0 0.0
        %729 = vmatpush1.msra.mxu0 0.0
        %730 = vmatprep.subr.mxu0 0.0
        %731 = vmatpush1.msra.mxu0 0.0
        %732 = vmatprep.subr.mxu0 0.0
        %733 = vmatpush1.msra.mxu0 0.0
        %734 = vmatprep.subr.mxu0 0.0
        %735 = vmatpush1.msra.mxu0 0.0
        %736 = vmatprep.subr.mxu0 0.0
        %737 = vmatpush1.msra.mxu0 0.0
        %738 = vmatprep.subr.mxu0 0.0
        %739 = vmatpush1.msra.mxu0 0.0
        %740 = vmatprep.subr.mxu0 0.0
        %741 = vmatpush1.msra.mxu0 0.0
        %742 = vmatprep.subr.mxu0 0.0
        %743 = vmatpush1.msra.mxu0 0.0
        %744 = vmatprep.subr.mxu0 0.0
        %745 = vmatpush1.msra.mxu0 0.0
        %746 = vmatprep.mubr.f32.mxu0 0.0
        %747 = vmatmul.mubr.f32.gmra.mrb[0].mxu0 %v680
        %v748 = vpop.f32.mrb[0].mxu0
        %v749 = vadd.f32 0.0, %v748
        %v750 = vpop.f32.mrb[0].mxu0
        %751 = vdwg.mxu0
        %752 = vst.msk [vmem:[%s316] sm:$0xff] %vm590, %v749
        %753 = vst.msk [vmem:[%s323] sm:$0xff] %vm667, %v678
        %s754 = sand.u32 %s200, 1
        %s755 = scalar_lea.sflag [#allocation5], %s754
        %s756 = sand.u32 %s200, 1
        %s757 = smul.addr %s756, 8
        %s758 = scalar_lea.vmem [#allocation4], %s757
        %s759 = sand.u32 %s228, 1
        %s760 = scalar_lea.sflag [#allocation7], %s759
        %s761 = sand.u32 %s228, 1
        %s762 = smul.addr %s761, 8
        %s763 = scalar_lea.vmem [#allocation6], %s762
        // Predicated region
        $region53: #{tpu_custom_call.1} parent=47 // pred_check
          %p764 = pneg %p210
        $region54: #{tpu_custom_call.1} parent=47 // pred_check_branch
          %766 = sbr.rel (%p764) target = $region56
        $region55: #{tpu_custom_call.1} parent=47 // pred_region
          %s768 = ssub.s32 128, 128
          %769 = vsyncadd %s755, %s768
          %s770 = sadd.s32 %s31, %s30
          %s771 = smul.addr %s770, 128
          %s772 = scalar_lea.hbm %s7, %s771
          %s774 = sshll.u32 %s758, 4
          %s775 = int_to_ptr.vmem [resolvable:$true] %s774
          %777 = dma.vmem_to_hbm [thread:$0]  %s775, 128, %s772, %s755
        $region56: #{tpu_custom_call.1} parent=47 // pred_fallthru
          _
        // Predicated region
        $region57: #{tpu_custom_call.1} parent=47 // pred_check
          %p778 = pneg %p238
        $region58: #{tpu_custom_call.1} parent=47 // pred_check_branch
          %780 = sbr.rel (%p778) target = $region60
        $region59: #{tpu_custom_call.1} parent=47 // pred_region
          %s782 = ssub.s32 128, 128
          %783 = vsyncadd %s760, %s782
          %s784 = sadd.s32 %s31, %s30
          %s785 = smul.addr %s784, 128
          %s786 = scalar_lea.hbm %s8, %s785
          %s788 = sshll.u32 %s763, 4
          %s789 = int_to_ptr.vmem [resolvable:$true] %s788
          %791 = dma.vmem_to_hbm [thread:$0]  %s789, 128, %s786, %s760
        $region60: #{tpu_custom_call.1} parent=47 // pred_fallthru
          _
      $region48: #{tpu_custom_call.1} parent=5 // pred_fallthru
        _
      %p792 = scmp.le.s32.totalorder 2, %s21
      // Predicated region
      $region61: #{tpu_custom_call.1} parent=5 // pred_check
        %p793 = pneg %p792
      $region62: #{tpu_custom_call.1} parent=5 // pred_check_branch
        %795 = sbr.rel (%p793) target = $region64
      $region63: #{tpu_custom_call.1} parent=5 // pred_region
        %s796 = ssub.s32 %s21, 2
        // Predicated region
        $region65: #{tpu_custom_call.1} parent=63 // pred_check
          %p797 = pneg %p216
        $region66: #{tpu_custom_call.1} parent=63 // pred_check_branch
          %799 = sbr.rel (%p797) target = $region68
        $region67: #{tpu_custom_call.1} parent=63 // pred_region
          %s800 = sand.u32 %s201, 1
          %s801 = scalar_lea.sflag [#allocation5], %s800
          %s802 = sand.u32 %s201, 1
          %s803 = smul.addr %s802, 8
          %s804 = scalar_lea.vmem [#allocation4], %s803
          %805 = dma.done %s801, 128
        $region68: #{tpu_custom_call.1} parent=63 // pred_fallthru
          _
        // Predicated region
        $region69: #{tpu_custom_call.1} parent=63 // pred_check
          %p806 = pneg %p244
        $region70: #{tpu_custom_call.1} parent=63 // pred_check_branch
          %808 = sbr.rel (%p806) target = $region72
        $region71: #{tpu_custom_call.1} parent=63 // pred_region
          %s809 = sand.u32 %s229, 1
          %s810 = scalar_lea.sflag [#allocation7], %s809
          %s811 = sand.u32 %s229, 1
          %s812 = smul.addr %s811, 8
          %s813 = scalar_lea.vmem [#allocation6], %s812
          %814 = dma.done %s810, 128
        $region72: #{tpu_custom_call.1} parent=63 // pred_fallthru
          _
      $region64: #{tpu_custom_call.1} parent=5 // pred_fallthru
        _
    $region6: #{tpu_custom_call.1} parent=1 // loop_footer
      %s25 = sadd.s32 1, %s21
    $region7: #{tpu_custom_call.1} parent=1 // loop_footer_branch
      %20 = sbr.rel target = $region3
    $region8: #{tpu_custom_call.1} parent=1 // loop_exit
      _
    %815 = vsyncpa [#allocation5], 1
    %s816 = scalar_lea.sflag [#allocation5], 1
    %817 = vsyncpa %s816, 1
    %818 = vsyncpa [#allocation7], 1
    %s819 = scalar_lea.sflag [#allocation7], 1
    %820 = vsyncpa %s819, 1

</llo_original>
